<compile_context>
chip_gen: v5e
topology: v5e:2x2
jax: 0.10.0
libtpu: 0.0.40
codegen_flags: <defaults>
</compile_context>

<pallas_src>
import numpy as np
import jax
import jax.numpy as jnp
from jax.experimental import pallas as pl
from jax.experimental.pallas import tpu as pltpu


_TARGET_BLOCK_BYTES = 2 << 20  # ~2 MiB per tile -> 2 arrays * 2 bufs = 8 MiB pipelined


# ----------------------------------------------------------------------------
# Kernel: elementwise  (1 + beta*x) * tanh(x)   (VPU + EUP work, mem-bound)
# ----------------------------------------------------------------------------
def _stan_all_kernel(x_ref, beta_ref, o_ref):
    x = x_ref[...].astype(jnp.float32)          # (block_rows, LANE)
    beta = beta_ref[...].astype(jnp.float32)    # (1, LANE) — broadcasts over rows
    o_ref[...] = ((1.0 + beta * x) * jnp.tanh(x)).astype(o_ref.dtype)


def _round_up(a, b):
    return ((a + b - 1) // b) * b


def _call_2d(x2, beta_row, block_rows):
    """x2: (R, LANE) with R % block_rows == 0; beta_row: (1, LANE)."""
    R, lane = x2.shape
    grid = (R // block_rows,)
    return pl.pallas_call(
        _stan_all_kernel,
        out_shape=jax.ShapeDtypeStruct((R, lane), x2.dtype),
        grid=grid,
        in_specs=[
            pl.BlockSpec((block_rows, lane), lambda i: (i, 0)),  # x tile
            pl.BlockSpec((1, lane), lambda i: (0, 0)),           # beta (resident)
        ],
        out_specs=pl.BlockSpec((block_rows, lane), lambda i: (i, 0)),
        compiler_params=pltpu.CompilerParams(
            dimension_semantics=("parallel",),  # v7x: shard row tiles across 2 TCs
        ),
    )(x2, beta_row)


def stan_all(x, beta):
    """Apply STanAll activation.  x: (..., H) feature-last, beta: (H,)."""
    orig_shape = x.shape
    H = orig_shape[-1]
    assert beta.shape == (H,)
    dtype = x.dtype
    bytes_per = jnp.dtype(dtype).itemsize

    # --- fast path: pack lane//H feature vectors per lane row (lane-dense) ---
    lane = None
    for cand in (512, 256, 128):
        if cand % H == 0:
            lane = cand
            break

    if lane is not None:
        n = int(np.prod(orig_shape))
        flat = x.reshape(-1)
        beta_row = jnp.tile(beta, lane // H).reshape(1, lane)

        rows_needed = pl.cdiv(n, lane)
        max_rows_by_bytes = max(8, (_TARGET_BLOCK_BYTES // (lane * bytes_per)) // 8 * 8)
        block_rows = max(8, min(1024, _round_up(rows_needed, 8)))
        block_rows = min(block_rows, max_rows_by_bytes)

        rows = _round_up(rows_needed, block_rows)
        n_pad = rows * lane
        if n_pad != n:
            flat = jnp.pad(flat, (0, n_pad - n))   # zeros -> activation(0) = 0
        x2 = flat.reshape(rows, lane)

        out2 = _call_2d(x2, beta_row, block_rows)
        return out2.reshape(-1)[:n].reshape(orig_shape)

    # --- general path: H does not divide 128 -> pad features up to 128k ------
    H_pad = _round_up(H, 128)
    M = int(np.prod(orig_shape[:-1])) if len(orig_shape) > 1 else 1
    x2 = x.reshape(M, H)
    if H_pad != H:
        x2 = jnp.pad(x2, ((0, 0), (0, H_pad - H)))
        beta_p = jnp.pad(beta, (0, H_pad - H))
    else:
        beta_p = beta
    beta_row = beta_p.reshape(1, H_pad)

    block_rows = max(8, min(1024, (_TARGET_BLOCK_BYTES // (H_pad * bytes_per)) // 8 * 8))
    block_rows = min(block_rows, _round_up(M, 8))
    M_pad = _round_up(M, block_rows)
    if M_pad != M:
        x2 = jnp.pad(x2, ((0, M_pad - M), (0, 0)))

    out2 = _call_2d(x2, beta_row, block_rows)
    return out2[:M, :H].reshape(orig_shape)


# ----------------------------------------------------------------------------
# Deterministic parameter init (matches the PyTorch module's __init__)
# ----------------------------------------------------------------------------
def make_beta(num_outs):
    gen = np.random.RandomState(seed=0)
    return jnp.asarray(gen.normal(size=num_outs), dtype=jnp.float32)


if __name__ == "__main__":
    # Primary check: H == num_outs == 32 (lane-dense packed path).
    B, S, H = 2, 8, 32
    beta = make_beta(H)
    key = jax.random.PRNGKey(0)
    x = jax.random.normal(key, (B, S, H), dtype=jnp.float32)

    out = jax.block_until_ready(stan_all(x, beta))
    ref = (1.0 + beta * x) * jnp.tanh(x)
    np.testing.assert_allclose(np.asarray(out), np.asarray(ref),
                               rtol=1e-6, atol=1e-6)

    # Secondary check: H that does not divide 128 (general padded-H path).
    H2 = 48
    beta2 = make_beta(H2)
    x2 = jax.random.normal(jax.random.PRNGKey(1), (B, S, H2), dtype=jnp.float32)
    out2 = jax.block_until_ready(stan_all(x2, beta2))
    ref2 = (1.0 + beta2 * x2) * jnp.tanh(x2)
    np.testing.assert_allclose(np.asarray(out2), np.asarray(ref2),
                               rtol=1e-6, atol=1e-6)

    print("KERNEL_OK")
</pallas_src>

<mosaic_0001>
module attributes {stable_mosaic.version = 11 : i64} {
  func.func @_stan_all_kernel(%arg0: i32, %arg1: memref<8x512xf32, #tpu.memory_space<vmem>>, %arg2: memref<1x512xf32, #tpu.memory_space<vmem>>, %arg3: memref<8x512xf32, #tpu.memory_space<vmem>>) attributes {dimension_semantics = [#tpu.dimension_semantics<parallel>], iteration_bounds = array<i64: 1>, scalar_prefetch = 0 : i64, scratch_operands = 0 : i64, tpu.core_type = #tpu.core_type<tc>, window_params = [{transform_indices = @transform_0, window_bounds = array<i64: 8, 512>}, {pipeline_mode = #tpu.pipeline_mode<synchronous>, transform_indices = @transform_1, window_bounds = array<i64: 1, 512>}, {transform_indices = @transform_2, window_bounds = array<i64: 8, 512>}]} {
    %c0 = arith.constant 0 : index
    %c0_0 = arith.constant 0 : index
    %0 = vector.load %arg1[%c0, %c0_0] : memref<8x512xf32, #tpu.memory_space<vmem>>, vector<8x512xf32>
    %c0_1 = arith.constant 0 : index
    %c0_2 = arith.constant 0 : index
    %1 = vector.load %arg2[%c0_1, %c0_2] : memref<1x512xf32, #tpu.memory_space<vmem>>, vector<1x512xf32>
    %2 = vector.broadcast %1 : vector<1x512xf32> to vector<8x512xf32>
    %3 = arith.mulf %2, %0 : vector<8x512xf32>
    %cst = arith.constant 1.000000e+00 : f32
    %4 = vector.broadcast %cst : f32 to vector<8x512xf32>
    %5 = arith.addf %4, %3 : vector<8x512xf32>
    %6 = math.tanh %0 : vector<8x512xf32>
    %7 = arith.mulf %5, %6 : vector<8x512xf32>
    %c0_3 = arith.constant 0 : index
    %c0_4 = arith.constant 0 : index
    %8 = vector.load %arg3[%c0_3, %c0_4] : memref<8x512xf32, #tpu.memory_space<vmem>>, vector<8x512xf32>
    tpu.vector_store %arg3[%c0_3, %c0_4], %7 {strides = array<i32>} : memref<8x512xf32, #tpu.memory_space<vmem>>, vector<8x512xf32>,
    return
  }
  func.func @transform_0(%arg0: i32) -> (i32, i32) {
    %c0_i32 = arith.constant 0 : i32
    %c0_i32_0 = arith.constant 0 : i32
    return %arg0, %c0_i32 : i32, i32
  }
  func.func @transform_1(%arg0: i32) -> (i32, i32) {
    %c0_i32 = arith.constant 0 : i32
    %c0_i32_0 = arith.constant 0 : i32
    %c0_i32_1 = arith.constant 0 : i32
    return %c0_i32, %c0_i32_0 : i32, i32
  }
  func.func @transform_2(%arg0: i32) -> (i32, i32) {
    %c0_i32 = arith.constant 0 : i32
    %c0_i32_0 = arith.constant 0 : i32
    return %arg0, %c0_i32 : i32, i32
  }
}

</mosaic_0001>

<llo_original>
// kernel: tpu_custom_call.1
$region0: #{tpu_custom_call.1}
  #allocation0 [shape = 'u32[]', space=smem, size = 0x4, offset = 0x4, fixed_abs, tag = 'smem constant byte address 0x4 - core index']
  #allocation1 [shape = 'u32[72,128]{1,0:T(1,128)}', space=vmem, size = 0x9000, scoped, tag = 'internal scratch']
  %s0 = inlined_call_operand.hbm [shape: f32[8,512], index: 0, kind: input, shape index: {}]
  %s1 = inlined_call_operand.hbm [shape: f32[1,512], index: 1, kind: input, shape index: {}]
  %s2 = inlined_call_operand.hbm [shape: f32[8,512], index: 2, kind: output, shape index: {}]
  %s3 = sld [smem:[#allocation0]]
  $region26: #{tpu_custom_call.1} parent=0
    _
  %s5 = ssub.s32 1, %s3
  %s6 = scalar_select 0, %s5, %s3
  $region1: #{tpu_custom_call.1} parent=0
    #allocation2 [shape = 'u8[16384]{0}', space=vmem, size = 0x4000, scoped, tag = 'input window, operand 0, single buffered']
    #allocation3 [shape = 's32[1]{0}', space=sflag, size = 0x4, scoped, tag = 'scoped memory for tpu_custom_call.1']
    #allocation4 [shape = 's32[1]{0}', space=sflag, size = 0x4, scoped, tag = 'scoped memory for tpu_custom_call.1']
    #allocation5 [shape = 'u8[2048]{0}', space=vmem, size = 0x800, scoped, tag = 'input window, operand 1, single buffered']
    #allocation6 [shape = 's32[1]{0}', space=sflag, size = 0x4, scoped, tag = 'scoped memory for tpu_custom_call.1']
    #allocation7 [shape = 'u8[16384]{0}', space=vmem, size = 0x4000, scoped, tag = 'output window, operand 0, single buffered']
    %7 = vsyncpa [#allocation3], 0
    %8 = vsyncpa [#allocation6], 0
    %9 = vsyncpa [#allocation4], 0
    // Predicated region
    $region2: #{tpu_custom_call.1} parent=1 // pred_check
      _
    $region3: #{tpu_custom_call.1} parent=1 // pred_check_branch
      %11 = sbr.rel (0) target = $region5
    $region4: #{tpu_custom_call.1} parent=1 // pred_region
      %13 = vsyncadd [#allocation3], 0
      %s15 = sshll.u32 %s0, 4
      %s16 = int_to_ptr.hbm [resolvable:$true] %s15
      %s17 = sshll.u32 [#allocation2], 4
      %s18 = int_to_ptr.vmem [resolvable:$true] %s17
      %20 = dma.hbm_to_vmem [thread:$0]  %s16, 512, %s18, [#allocation3]
    $region5: #{tpu_custom_call.1} parent=1 // pred_fallthru
      _
    // Predicated region
    $region6: #{tpu_custom_call.1} parent=1 // pred_check
      _
    $region7: #{tpu_custom_call.1} parent=1 // pred_check_branch
      %22 = sbr.rel (0) target = $region9
    $region8: #{tpu_custom_call.1} parent=1 // pred_region
      %24 = vsyncadd [#allocation6], 0
      %s26 = sshll.u32 %s1, 4
      %s27 = int_to_ptr.hbm [resolvable:$true] %s26
      %s28 = sshll.u32 [#allocation5], 4
      %s29 = int_to_ptr.vmem [resolvable:$true] %s28
      %31 = dma.hbm_to_vmem [thread:$0]  %s27, 64, %s29, [#allocation6]
    $region9: #{tpu_custom_call.1} parent=1 // pred_fallthru
      _
    // Predicated region
    $region10: #{tpu_custom_call.1} parent=1 // pred_check
      _
    $region11: #{tpu_custom_call.1} parent=1 // pred_check_branch
      %33 = sbr.rel (0) target = $region13
    $region12: #{tpu_custom_call.1} parent=1 // pred_region
      %35 = dma.done [#allocation3], 512
    $region13: #{tpu_custom_call.1} parent=1 // pred_fallthru
      _
    // Predicated region
    $region14: #{tpu_custom_call.1} parent=1 // pred_check
      _
    $region15: #{tpu_custom_call.1} parent=1 // pred_check_branch
      %37 = sbr.rel (0) target = $region17
    $region16: #{tpu_custom_call.1} parent=1 // pred_region
      %39 = dma.done [#allocation6], 64
    $region17: #{tpu_custom_call.1} parent=1 // pred_fallthru
      _
    %v40 = vld [vmem:[#allocation2] sm:$0xff]
    %v41 = vld [vmem:[#allocation2 + $0x8] sm:$0xff]
    %v42 = vld [vmem:[#allocation2 + $0x10] sm:$0xff]
    %v43 = vld [vmem:[#allocation2 + $0x18] sm:$0xff]
    %v44 = vld [vmem:[#allocation5] sm:$0xf]
    %v46 = vperm.slane %v44, 0
    %v47 = vperm.slane %v44, 1
    %v48 = vperm.slane %v44, 2
    %v49 = vperm.slane %v44, 3
    %v54 = vmul.f32 %v46, %v40
    %v55 = vmul.f32 %v47, %v41
    %v56 = vmul.f32 %v48, %v42
    %v57 = vmul.f32 %v49, %v43
    %v58 = vadd.f32 %v54, 1.0
    %v59 = vadd.f32 %v55, 1.0
    %v60 = vadd.f32 %v56, 1.0
    %v61 = vadd.f32 %v57, 1.0
    %v62 = vtanh.pop %v40
    %v63 = vtanh.pop %v41
    %v64 = vtanh.pop %v42
    %v65 = vtanh.pop %v43
    %v66 = vmul.f32 %v58, %v62
    %v67 = vmul.f32 %v59, %v63
    %v68 = vmul.f32 %v60, %v64
    %v69 = vmul.f32 %v61, %v65
    %70 = vst [vmem:[#allocation7] sm:$0xff] %v66
    %71 = vst [vmem:[#allocation7 + $0x8] sm:$0xff] %v67
    %72 = vst [vmem:[#allocation7 + $0x10] sm:$0xff] %v68
    %73 = vst [vmem:[#allocation7 + $0x18] sm:$0xff] %v69
    // Predicated region
    $region18: #{tpu_custom_call.1} parent=1 // pred_check
      _
    $region19: #{tpu_custom_call.1} parent=1 // pred_check_branch
      %75 = sbr.rel (0) target = $region21
    $region20: #{tpu_custom_call.1} parent=1 // pred_region
      %77 = vsyncadd [#allocation4], 0
      %s79 = sshll.u32 [#allocation7], 4
      %s80 = int_to_ptr.vmem [resolvable:$true] %s79
      %s81 = sshll.u32 %s2, 4
      %s82 = int_to_ptr.hbm [resolvable:$true] %s81
      %84 = dma.vmem_to_hbm [thread:$0]  %s80, 512, %s82, [#allocation4]
    $region21: #{tpu_custom_call.1} parent=1 // pred_fallthru
      _
    // Predicated region
    $region22: #{tpu_custom_call.1} parent=1 // pred_check
      _
    $region23: #{tpu_custom_call.1} parent=1 // pred_check_branch
      %86 = sbr.rel (0) target = $region25
    $region24: #{tpu_custom_call.1} parent=1 // pred_region
      %88 = dma.done [#allocation4], 512
    $region25: #{tpu_custom_call.1} parent=1 // pred_fallthru
      _
    %89 = vsyncpa [#allocation3], 1
    %90 = vsyncpa [#allocation6], 1
    %91 = vsyncpa [#allocation4], 1

</llo_original>
